<compile_context>
chip_gen: v7x
topology: tpu7x:2x2x1
jax: 0.10.0
libtpu: 0.0.40
codegen_flags: <defaults>
</compile_context>

<pallas_src>
import jax
import jax.numpy as jnp
from jax.experimental import pallas as pl
from jax.experimental.pallas import tpu as pltpu


# ----------------------------------------------------------------------------
# Kernel
# ----------------------------------------------------------------------------
def _make_cd_kernel(r_tile, tb, n_layers):
    """Fused linear chain over a folded (r_tile*tb, C) row block.

    refs = (x_ref, w0, b0, w1, b1, ..., o_ref)
      x_ref : (r_tile*tb, C)      -- r_tile repeat-slices of tb batch rows
      w_l   : (C_l, F_l)          -- resident weights (constant index_map)
      b_l   : (1,  F_l)           -- resident bias
      o_ref : (tb, r_tile*F_last) -- this step's columns of the torch.cat output
    """

    def kernel(x_ref, *refs):
        o_ref = refs[-1]
        wb = refs[:-1]
        # One matmul per layer over the folded M = r_tile*tb rows.  Operands
        # stay in the weight dtype (native bf16 MXU path when weights are
        # bf16); accumulation is f32 via preferred_element_type.
        h = x_ref[...]
        for layer in range(n_layers):
            w = wb[2 * layer][...]
            b = wb[2 * layer + 1][...]
            h = jnp.dot(h.astype(w.dtype), w, preferred_element_type=jnp.float32)
            h = h + b.astype(jnp.float32)
        f_out = o_ref.shape[-1] // r_tile
        # Scatter the r_tile per-repeat row blocks into torch.cat column order.
        for k in range(r_tile):
            o_ref[:, k * f_out:(k + 1) * f_out] = (
                h[k * tb:(k + 1) * tb, :].astype(o_ref.dtype))

    return kernel


# ----------------------------------------------------------------------------
# Tiling / VMEM planning
# ----------------------------------------------------------------------------
def _vmem_budget_bytes():
    # Per-generation physical VMEM: 128 MiB (v5e/v6e), 64 MiB per core (v7x).
    phys = 64 * 1024 * 1024
    try:
        info = pltpu.get_tpu_info()
        cap = int(getattr(info, "vmem_capacity_bytes", phys))
        if cap > 0:
            phys = cap
    except Exception:
        pass
    # Explicit vmem_limit_bytes with ~25% headroom for compiler scratch.
    return int(phys * 0.75)


def _step_bytes(tb, r, c, widths, in_item, out_item):
    """Per-grid-step VMEM footprint of the streamed tiles (double-buffered)."""
    m = r * tb
    x_b = m * c * in_item                  # input tile
    o_b = m * widths[-1] * out_item        # output tile (tb rows x r*F cols)
    h_b = m * max(widths) * 4              # f32 intermediate
    return 2 * (x_b + o_b) + 2 * h_b


def _plan_tiles(B, R, C, widths, in_item, out_item, w_bytes, budget):
    """Pick (batch_tile, repeat_tile) or None (-> XLA fallback)."""
    F = widths[-1]
    avail = int(0.8 * budget) - 2 * w_bytes   # resident (double-buffered) params
    if avail <= 0:
        return None
    sub = 32 // max(in_item, 1)               # sublanes/vreg row: f32 8, bf16 16, i8 32

    # ---- batch tile ---------------------------------------------------------
    if B <= 512:
        tb_cands = [B]                         # small-batch regime: full batch
    else:
        divs = [d for d in range(8, 513, 8) if B % d == 0]
        pref = sorted([d for d in divs if d % sub == 0], reverse=True)
        rest = sorted(set(divs) - set(pref), reverse=True)
        tb_cands = (pref + rest) or [B]        # B itself only as a last resort

    for tb in tb_cands:
        # ---- repeat tile ----------------------------------------------------
        # Folding repeats into M is only layout-valid at full-batch tiles
        # (contiguous rows of the folded (R*B, C) matrix).
        cands = ([d for d in range(1, R + 1) if R % d == 0] if tb == B else [1])
        legal = [d for d in cands
                 if ((d * F) % 128 == 0 or d == R)              # lane-dense out block
                 and ((d * tb) % 8 == 0 or d * tb == R * B)]    # sublane-legal in block
        fit = [d for d in legal
               if _step_bytes(tb, d, C, widths, in_item, out_item) <= avail]
        if not fit:
            continue
        # Fill the MXU M dimension (~256 rows) but don't over-fold.
        good = [d for d in fit if d * tb >= 256]
        r = min(good) if good else max(fit)
        # v7x megacore: keep >= 2 parallel grid blocks when a smaller repeat
        # tile still fills >= 128 MXU rows (don't trade MXU fill for it).
        if (B // tb) * (R // r) == 1:
            alt = [d for d in fit if d < r and d * tb >= 128]
            if alt:
                r = max(alt)
        return tb, r
    return None


# ----------------------------------------------------------------------------
# Fused forward + fallbacks
# ----------------------------------------------------------------------------
def _cd_linear_fused(x, layers, tb, r_tile, vmem_limit):
    B, C, R = x.shape
    F = layers[-1][0].shape[1]
    nb, nr = B // tb, R // r_tile

    # Layout plumbing: repeat-major fold so every grid step reads one
    # contiguous, lane-dense (r_tile*tb, C) slab and the kernel's matmul M
    # dimension covers r_tile repeats at once.
    # TODO(synk): accept a pre-folded (R*B, C) input layout from the caller to
    # avoid this extra HBM transpose pass for very large inputs.
    x_f = jnp.transpose(x, (2, 0, 1)).reshape(R * B, C)

    in_specs = [pl.BlockSpec((r_tile * tb, C), lambda bi, rj: (rj * nb + bi, 0))]
    flat_params = []
    for (w, b) in layers:
        # Constant index_map -> parameters stay resident in VMEM.
        # TODO(synk): pipeline_mode=pl.Buffered(1) on these specs would halve
        # their VMEM footprint (fetched once); left at default buffering for
        # lowering safety.
        in_specs.append(pl.BlockSpec(w.shape, lambda bi, rj: (0, 0)))
        in_specs.append(pl.BlockSpec(b.shape, lambda bi, rj: (0, 0)))
        flat_params += [w, b]

    # Output produced directly in torch.cat order: grid step (bi, rj) writes
    # the (tb, r_tile*F) block at rows bi, column-block rj.
    out_spec = pl.BlockSpec((tb, r_tile * F), lambda bi, rj: (bi, rj))

    cat = pl.pallas_call(
        _make_cd_kernel(r_tile, tb, len(layers)),
        out_shape=jax.ShapeDtypeStruct((B, R * F), x.dtype),
        grid_spec=pltpu.PrefetchScalarGridSpec(
            num_scalar_prefetch=0,
            grid=(nb, nr),
            in_specs=in_specs,
            out_specs=out_spec),
        compiler_params=pltpu.CompilerParams(
            # Disjoint output blocks per grid step -> both axes parallel
            # (sharded across the two TensorCores on v7x).
            dimension_semantics=("parallel", "parallel"),
            vmem_limit_bytes=int(vmem_limit)),
    )(x_f, *flat_params)

    # torch.reshape(cat, (B, cat.shape[1] // R, R)): row-major reinterpretation.
    return cat.reshape(B, F, R)


def _cd_linear_xla(x, layers):
    """Folded XLA matmul chain (used when weights exceed the VMEM budget)."""
    B, C, R = x.shape
    F = layers[-1][0].shape[1]
    h = jnp.transpose(x, (2, 0, 1)).reshape(R * B, C)
    for (w, b) in layers:
        h = jnp.dot(h.astype(w.dtype), w,
                    preferred_element_type=jnp.float32) + b.astype(jnp.float32)
    cat = jnp.transpose(h.reshape(R, B, F), (1, 0, 2)).reshape(B, R * F)
    return cat.reshape(B, F, R).astype(x.dtype)


def channel_distributed_linear(x, layers):
    """Fused ChannelDistributed forward for a chain of Linear layers.

    x      : (B, C, R) array.
    layers : list of (w, b), w: (C_l, F_l), b: (1, F_l), chained in order.
    Returns (B, F_last, R), identical to
      torch.cat([model(x[:, :, i]) for i in range(R)], 1).reshape(B, F_last, R)
    """
    B, C, R = x.shape
    widths = [C] + [w.shape[1] for (w, _) in layers]
    in_item = x.dtype.itemsize
    out_item = in_item
    w_bytes = sum(int(w.size) * w.dtype.itemsize + int(b.size) * b.dtype.itemsize
                  for (w, b) in layers)
    budget = _vmem_budget_bytes()
    plan = _plan_tiles(B, R, C, widths, in_item, out_item, w_bytes, budget)
    if plan is None:
        # TODO(synk): K/N-tiled fused path (grid over C with an f32 accumulator,
        # "arbitrary" semantics) for layers whose weights exceed VMEM; for now
        # fall back to a single folded XLA matmul chain.
        return _cd_linear_xla(x, layers)
    tb, r_tile = plan
    return _cd_linear_fused(x, layers, tb, r_tile, budget)


# ----------------------------------------------------------------------------
# Module wrappers
# ----------------------------------------------------------------------------
class PallasLinear:
    """Linear layer (y = x @ W + b).  Inside ChannelDistributed its application
    is fused into the Pallas kernel; the standalone __call__ is plain JAX and
    only used by the generic (non-fused) fallback path."""

    def __init__(self, key, in_features, out_features, dtype=jnp.float32):
        kw, kb = jax.random.split(key)
        scale = 1.0 / (in_features ** 0.5)
        self.w = jax.random.uniform(kw, (in_features, out_features), dtype=jnp.float32,
                                    minval=-scale, maxval=scale).astype(dtype)
        self.b = jax.random.uniform(kb, (1, out_features), dtype=jnp.float32,
                                    minval=-scale, maxval=scale).astype(dtype)

    def __call__(self, h):
        return h @ self.w + self.b


class ChannelDistributed:
    """JAX/Pallas equivalent of the PyTorch ChannelDistributed module."""

    def __init__(self, *models):
        assert len(models) > 0, 'ChannelDistributed needs 1+ models to apply'
        # PyTorch wraps 2+ models in nn.Sequential; we keep the flat chain.
        self.models = list(models)
        self._all_linear = all(isinstance(m, PallasLinear) for m in self.models)

    def __call__(self, x):
        x = jnp.asarray(x)
        if self._all_linear and x.ndim == 3:
            return channel_distributed_linear(x, [(m.w, m.b) for m in self.models])
        # TODO(synk): non-Linear sub-models or non-3D inputs fall back to the
        # per-slice glue loop mirroring the PyTorch forward (no fused kernel).
        n_repeat = x.shape[2]
        ys = []
        for i in range(n_repeat):
            h = x[:, :, i]
            for m in self.models:
                h = m(h)
            ys.append(h)
        cat = jnp.concatenate(ys, axis=1)
        return cat.reshape(cat.shape[0], cat.shape[1] // n_repeat, n_repeat)


# ----------------------------------------------------------------------------
# Pure-JAX reference (validation only)
# ----------------------------------------------------------------------------
def _reference_forward(x, layers):
    """Replica of the PyTorch forward (slice -> linear chain -> cat -> reshape),
    computed in f32 for comparison."""
    B, _, R = x.shape
    ys = []
    for i in range(R):
        h = x[:, :, i].astype(jnp.float32)
        for (w, b) in layers:
            h = h @ w.astype(jnp.float32) + b.astype(jnp.float32)
        ys.append(h)
    cat = jnp.concatenate(ys, axis=1)
    return cat.reshape(B, cat.shape[1] // R, R)


if __name__ == "__main__":
    key = jax.random.PRNGKey(0)
    kx, k1, k2, k3, k4 = jax.random.split(key, 5)

    B, C, R = 2, 32, 8       # (batch, channels, n_repeat)
    H, F = 64, 128           # hidden width / output features

    x = jax.random.normal(kx, (B, C, R), dtype=jnp.float32)

    # Case 1: a single Linear model, lane-aligned feature width.
    lin = PallasLinear(k1, C, F)
    cd1 = ChannelDistributed(lin)
    y1 = jax.block_until_ready(cd1(x))
    ref1 = _reference_forward(x, [(lin.w, lin.b)])
    assert y1.shape == (B, F, R), y1.shape
    assert jnp.allclose(y1, ref1, atol=2e-2, rtol=2e-2), "single-model mismatch"

    # Case 2: two models (PyTorch would wrap them in nn.Sequential).
    lin_a = PallasLinear(k2, C, H)
    lin_b = PallasLinear(k3, H, F)
    cd2 = ChannelDistributed(lin_a, lin_b)
    y2 = jax.block_until_ready(cd2(x))
    ref2 = _reference_forward(x, [(lin_a.w, lin_a.b), (lin_b.w, lin_b.b)])
    assert y2.shape == (B, F, R), y2.shape
    assert jnp.allclose(y2, ref2, atol=2e-2, rtol=2e-2), "sequential mismatch"

    # Case 3: bf16 operands + non-128-aligned feature width (stays on the fused
    # path: exercises the relaxed output-width gate and bf16 MXU operands).
    F3 = 96
    x_bf = x.astype(jnp.bfloat16)
    lin_c = PallasLinear(k4, C, F3, dtype=jnp.bfloat16)
    cd3 = ChannelDistributed(lin_c)
    y3 = jax.block_until_ready(cd3(x_bf))
    ref3 = _reference_forward(x_bf, [(lin_c.w, lin_c.b)])
    assert y3.shape == (B, F3, R), y3.shape
    assert jnp.allclose(y3.astype(jnp.float32), ref3, atol=6e-2, rtol=6e-2), \
        "bf16 / non-aligned-F mismatch"

    print("KERNEL_OK")
</pallas_src>

<mosaic_0001>
module attributes {stable_mosaic.version = 11 : i64} {
  func.func @kernel(%arg0: i32, %arg1: i32, %arg2: memref<16x32xf32, #tpu.memory_space<vmem>>, %arg3: memref<32x128xf32, #tpu.memory_space<vmem>>, %arg4: memref<1x128xf32, #tpu.memory_space<vmem>>, %arg5: memref<2x1024xf32, #tpu.memory_space<vmem>>) attributes {dimension_semantics = [#tpu.dimension_semantics<parallel>, #tpu.dimension_semantics<parallel>], iteration_bounds = array<i64: 1, 1>, scalar_prefetch = 0 : i64, scratch_operands = 0 : i64, tpu.core_type = #tpu.core_type<tc>, window_params = [{transform_indices = @transform_0, window_bounds = array<i64: 16, 32>}, {pipeline_mode = #tpu.pipeline_mode<synchronous>, transform_indices = @transform_1, window_bounds = array<i64: 32, 128>}, {pipeline_mode = #tpu.pipeline_mode<synchronous>, transform_indices = @transform_2, window_bounds = array<i64: 1, 128>}, {transform_indices = @transform_3, window_bounds = array<i64: 2, 1024>}]} {
    %c0 = arith.constant 0 : index
    %c0_0 = arith.constant 0 : index
    %0 = vector.load %arg2[%c0, %c0_0] : memref<16x32xf32, #tpu.memory_space<vmem>>, vector<16x32xf32>
    %c0_1 = arith.constant 0 : index
    %c0_2 = arith.constant 0 : index
    %1 = vector.load %arg3[%c0_1, %c0_2] : memref<32x128xf32, #tpu.memory_space<vmem>>, vector<32x128xf32>
    %c0_3 = arith.constant 0 : index
    %c0_4 = arith.constant 0 : index
    %2 = vector.load %arg4[%c0_3, %c0_4] : memref<1x128xf32, #tpu.memory_space<vmem>>, vector<1x128xf32>
    %cst = arith.constant dense<0.000000e+00> : vector<16x128xf32>
    %3 = tpu.matmul %0, %1, %cst {dimension_numbers = #tpu.dot_dimension_numbers<[1], [0], [0], [1], [0, 0, 1, 1], [], []>} : vector<16x32xf32>, vector<32x128xf32>, vector<16x128xf32> -> vector<16x128xf32>
    %4 = vector.broadcast %2 : vector<1x128xf32> to vector<16x128xf32>
    %5 = arith.addf %3, %4 : vector<16x128xf32>
    %6 = vector.extract_strided_slice %5 {offsets = [0, 0], sizes = [2, 128], strides = [1, 1]} : vector<16x128xf32> to vector<2x128xf32>
    %c0_5 = arith.constant 0 : index
    %c0_6 = arith.constant 0 : index
    %7 = vector.load %arg5[%c0_5, %c0_6] : memref<2x1024xf32, #tpu.memory_space<vmem>>, vector<2x128xf32>
    tpu.vector_store %arg5[%c0_5, %c0_6], %6 {strides = array<i32>} : memref<2x1024xf32, #tpu.memory_space<vmem>>, vector<2x128xf32>,
    %8 = vector.extract_strided_slice %5 {offsets = [2, 0], sizes = [2, 128], strides = [1, 1]} : vector<16x128xf32> to vector<2x128xf32>
    %c0_7 = arith.constant 0 : index
    %c128 = arith.constant 128 : index
    %9 = vector.load %arg5[%c0_7, %c128] : memref<2x1024xf32, #tpu.memory_space<vmem>>, vector<2x128xf32>
    tpu.vector_store %arg5[%c0_7, %c128], %8 {strides = array<i32>} : memref<2x1024xf32, #tpu.memory_space<vmem>>, vector<2x128xf32>,
    %10 = vector.extract_strided_slice %5 {offsets = [4, 0], sizes = [2, 128], strides = [1, 1]} : vector<16x128xf32> to vector<2x128xf32>
    %c0_8 = arith.constant 0 : index
    %c256 = arith.constant 256 : index
    %11 = vector.load %arg5[%c0_8, %c256] : memref<2x1024xf32, #tpu.memory_space<vmem>>, vector<2x128xf32>
    tpu.vector_store %arg5[%c0_8, %c256], %10 {strides = array<i32>} : memref<2x1024xf32, #tpu.memory_space<vmem>>, vector<2x128xf32>,
    %12 = vector.extract_strided_slice %5 {offsets = [6, 0], sizes = [2, 128], strides = [1, 1]} : vector<16x128xf32> to vector<2x128xf32>
    %c0_9 = arith.constant 0 : index
    %c384 = arith.constant 384 : index
    %13 = vector.load %arg5[%c0_9, %c384] : memref<2x1024xf32, #tpu.memory_space<vmem>>, vector<2x128xf32>
    tpu.vector_store %arg5[%c0_9, %c384], %12 {strides = array<i32>} : memref<2x1024xf32, #tpu.memory_space<vmem>>, vector<2x128xf32>,
    %14 = vector.extract_strided_slice %5 {offsets = [8, 0], sizes = [2, 128], strides = [1, 1]} : vector<16x128xf32> to vector<2x128xf32>
    %c0_10 = arith.constant 0 : index
    %c512 = arith.constant 512 : index
    %15 = vector.load %arg5[%c0_10, %c512] : memref<2x1024xf32, #tpu.memory_space<vmem>>, vector<2x128xf32>
    tpu.vector_store %arg5[%c0_10, %c512], %14 {strides = array<i32>} : memref<2x1024xf32, #tpu.memory_space<vmem>>, vector<2x128xf32>,
    %16 = vector.extract_strided_slice %5 {offsets = [10, 0], sizes = [2, 128], strides = [1, 1]} : vector<16x128xf32> to vector<2x128xf32>
    %c0_11 = arith.constant 0 : index
    %c640 = arith.constant 640 : index
    %17 = vector.load %arg5[%c0_11, %c640] : memref<2x1024xf32, #tpu.memory_space<vmem>>, vector<2x128xf32>
    tpu.vector_store %arg5[%c0_11, %c640], %16 {strides = array<i32>} : memref<2x1024xf32, #tpu.memory_space<vmem>>, vector<2x128xf32>,
    %18 = vector.extract_strided_slice %5 {offsets = [12, 0], sizes = [2, 128], strides = [1, 1]} : vector<16x128xf32> to vector<2x128xf32>
    %c0_12 = arith.constant 0 : index
    %c768 = arith.constant 768 : index
    %19 = vector.load %arg5[%c0_12, %c768] : memref<2x1024xf32, #tpu.memory_space<vmem>>, vector<2x128xf32>
    tpu.vector_store %arg5[%c0_12, %c768], %18 {strides = array<i32>} : memref<2x1024xf32, #tpu.memory_space<vmem>>, vector<2x128xf32>,
    %20 = vector.extract_strided_slice %5 {offsets = [14, 0], sizes = [2, 128], strides = [1, 1]} : vector<16x128xf32> to vector<2x128xf32>
    %c0_13 = arith.constant 0 : index
    %c896 = arith.constant 896 : index
    %21 = vector.load %arg5[%c0_13, %c896] : memref<2x1024xf32, #tpu.memory_space<vmem>>, vector<2x128xf32>
    tpu.vector_store %arg5[%c0_13, %c896], %20 {strides = array<i32>} : memref<2x1024xf32, #tpu.memory_space<vmem>>, vector<2x128xf32>,
    return
  }
  func.func @transform_0(%arg0: i32, %arg1: i32) -> (i32, i32) {
    %c1_i32 = arith.constant 1 : i32
    %0 = arith.muli %arg1, %c1_i32 : i32
    %1 = arith.addi %0, %arg0 : i32
    %c0_i32 = arith.constant 0 : i32
    %c0_i32_0 = arith.constant 0 : i32
    return %1, %c0_i32 : i32, i32
  }
  func.func @transform_1(%arg0: i32, %arg1: i32) -> (i32, i32) {
    %c0_i32 = arith.constant 0 : i32
    %c0_i32_0 = arith.constant 0 : i32
    %c0_i32_1 = arith.constant 0 : i32
    return %c0_i32, %c0_i32_0 : i32, i32
  }
  func.func @transform_2(%arg0: i32, %arg1: i32) -> (i32, i32) {
    %c0_i32 = arith.constant 0 : i32
    %c0_i32_0 = arith.constant 0 : i32
    %c0_i32_1 = arith.constant 0 : i32
    return %c0_i32, %c0_i32_0 : i32, i32
  }
  func.func @transform_3(%arg0: i32, %arg1: i32) -> (i32, i32) {
    %c0_i32 = arith.constant 0 : i32
    return %arg0, %arg1 : i32, i32
  }
}

</mosaic_0001>

<llo_original>
// kernel: tpu_custom_call.1
$region0: #{tpu_custom_call.1}
  #allocation0 [shape = 'u32[]', space=smem, size = 0x4, offset = 0x4, fixed_abs, tag = 'smem constant byte address 0x4 - core index']
  #allocation1 [shape = 'u32[144,128]{1,0:T(1,128)}', space=vmem, size = 0x12000, scoped, tag = 'internal scratch']
  %s0 = inlined_call_operand.hbm [shape: f32[16,32], index: 0, kind: input, shape index: {}]
  %s1 = inlined_call_operand.hbm [shape: f32[32,128], index: 1, kind: input, shape index: {}]
  %s2 = inlined_call_operand.vmem [shape: f32[1,128], index: 2, kind: input, shape index: {}]
  %s3 = inlined_call_operand.hbm [shape: f32[2,1024], index: 3, kind: output, shape index: {}]
  %s4 = sld [smem:[#allocation0]]
  $region30: #{tpu_custom_call.1} parent=0
    _
  %s6 = ssub.s32 1, %s4
  %s7 = scalar_select 0, %s6, %s4
  $region1: #{tpu_custom_call.1} parent=0
    #allocation2 [shape = 'u8[8192]{0}', space=vmem, size = 0x2000, scoped, tag = 'input window, operand 0, single buffered']
    #allocation3 [shape = 's32[1]{0}', space=sflag, size = 0x4, scoped, tag = 'scoped memory for tpu_custom_call.1']
    #allocation4 [shape = 's32[1]{0}', space=sflag, size = 0x4, scoped, tag = 'scoped memory for tpu_custom_call.1']
    #allocation5 [shape = 'u8[16384]{0}', space=vmem, size = 0x4000, scoped, tag = 'input window, operand 1, single buffered']
    #allocation6 [shape = 's32[1]{0}', space=sflag, size = 0x4, scoped, tag = 'scoped memory for tpu_custom_call.1']
    #allocation7 [shape = 'u8[8192]{0}', space=vmem, size = 0x2000, scoped, tag = 'output window, operand 0, single buffered']
    %8 = vsyncpa [#allocation3], 0
    %9 = vsyncpa [#allocation6], 0
    %10 = vsyncpa [#allocation4], 0
    // Predicated region
    $region2: #{tpu_custom_call.1} parent=1 // pred_check
      _
    $region3: #{tpu_custom_call.1} parent=1 // pred_check_branch
      %12 = sbr.rel (0) target = $region5
    $region4: #{tpu_custom_call.1} parent=1 // pred_region
      %s13 = sadd.s32 0, 0
      %s14 = smul.u32 2, %s13
      %s16 = ssub.s32 256, 256
      %17 = vsyncadd [#allocation3], %s16
      %s18 = smul.addr %s14, 128
      %s19 = scalar_lea.hbm %s0, %s18
      %s20 = sshll.u32 [#allocation2], 4
      %s21 = int_to_ptr.vmem [resolvable:$true] %s20
      %26 = dma.hbm_to_vmem [thread:$0]  %s19, 256, %s21, [#allocation3], 128, 128, 8
    $region5: #{tpu_custom_call.1} parent=1 // pred_fallthru
      _
    // Predicated region
    $region6: #{tpu_custom_call.1} parent=1 // pred_check
      _
    $region7: #{tpu_custom_call.1} parent=1 // pred_check_branch
      %28 = sbr.rel (0) target = $region9
    $region8: #{tpu_custom_call.1} parent=1 // pred_region
      %s30 = ssub.s32 512, 512
      %31 = vsyncadd [#allocation6], %s30
      %s32 = sshll.u32 [#allocation5], 4
      %s33 = int_to_ptr.vmem [resolvable:$true] %s32
      %38 = dma.hbm_to_vmem [thread:$0]  %s1, 512, %s33, [#allocation6], 128, 128, 8
    $region9: #{tpu_custom_call.1} parent=1 // pred_fallthru
      _
    // Predicated region
    $region10: #{tpu_custom_call.1} parent=1 // pred_check
      _
    $region11: #{tpu_custom_call.1} parent=1 // pred_check_branch
      %40 = sbr.rel (0) target = $region13
    $region12: #{tpu_custom_call.1} parent=1 // pred_region
      _
    $region13: #{tpu_custom_call.1} parent=1 // pred_fallthru
      _
    // Predicated region
    $region14: #{tpu_custom_call.1} parent=1 // pred_check
      _
    $region15: #{tpu_custom_call.1} parent=1 // pred_check_branch
      %42 = sbr.rel (0) target = $region17
    $region16: #{tpu_custom_call.1} parent=1 // pred_region
      %43 = dma.done [#allocation3], 256
    $region17: #{tpu_custom_call.1} parent=1 // pred_fallthru
      _
    // Predicated region
    $region18: #{tpu_custom_call.1} parent=1 // pred_check
      _
    $region19: #{tpu_custom_call.1} parent=1 // pred_check_branch
      %45 = sbr.rel (0) target = $region21
    $region20: #{tpu_custom_call.1} parent=1 // pred_region
      %46 = dma.done [#allocation6], 512
    $region21: #{tpu_custom_call.1} parent=1 // pred_fallthru
      _
    %s47 = sadd.s32 0, 0
    %s48 = smul.u32 2, %s47
    %v49 = vld [vmem:[#allocation2] sm:$0xff]
    %v50 = vld [vmem:[#allocation2 + $0x8] sm:$0xff]
    %v51 = vld [vmem:[#allocation5] sm:$0xff]
    %v52 = vld [vmem:[#allocation5 + $0x8] sm:$0xff]
    %v53 = vld [vmem:[#allocation5 + $0x10] sm:$0xff]
    %v54 = vld [vmem:[#allocation5 + $0x18] sm:$0xff]
    %v55 = vld [vmem:[%s2] sm:$0x1]
    %v57 = vlaneseq
    %v58 = vshrl.u32 %v57, 7
    %v59 = vsub.s32 0, %v58
    %v60 = vrot.slane %v55, %v59
    %vm62 = vcmask 261120
    %v64 = vsel %vm62, %v49, 0
    %v67 = vsel %vm62, %v50, 0
    %69 = vmatprep.subr.mxu0 0.0
    %70 = vmatpush1.msra.mxu0 %v51
    %71 = vmatprep.subr.mxu0 0.0
    %72 = vmatpush1.msra.mxu0 %v52
    %73 = vmatprep.subr.mxu0 0.0
    %74 = vmatpush1.msra.mxu0 %v53
    %75 = vmatprep.subr.mxu0 0.0
    %76 = vmatpush1.msra.mxu0 %v54
    %77 = vmatprep.subr.mxu0 0.0
    %78 = vmatpush1.msra.mxu0 0.0
    %79 = vmatprep.subr.mxu0 0.0
    %80 = vmatpush1.msra.mxu0 0.0
    %81 = vmatprep.subr.mxu0 0.0
    %82 = vmatpush1.msra.mxu0 0.0
    %83 = vmatprep.subr.mxu0 0.0
    %84 = vmatpush1.msra.mxu0 0.0
    %85 = vmatprep.subr.mxu0 0.0
    %86 = vmatpush1.msra.mxu0 0.0
    %87 = vmatprep.subr.mxu0 0.0
    %88 = vmatpush1.msra.mxu0 0.0
    %89 = vmatprep.subr.mxu0 0.0
    %90 = vmatpush1.msra.mxu0 0.0
    %91 = vmatprep.subr.mxu0 0.0
    %92 = vmatpush1.msra.mxu0 0.0
    %93 = vmatprep.subr.mxu0 0.0
    %94 = vmatpush1.msra.mxu0 0.0
    %95 = vmatprep.subr.mxu0 0.0
    %96 = vmatpush1.msra.mxu0 0.0
    %97 = vmatprep.subr.mxu0 0.0
    %98 = vmatpush1.msra.mxu0 0.0
    %99 = vmatprep.subr.mxu0 0.0
    %100 = vmatpush1.msra.mxu0 0.0
    %101 = vmatprep.subr.mxu0 0.0
    %102 = vmatpush1.msra.mxu0 0.0
    %103 = vmatprep.subr.mxu0 0.0
    %104 = vmatpush1.msra.mxu0 0.0
    %105 = vmatprep.subr.mxu0 0.0
    %106 = vmatpush1.msra.mxu0 0.0
    %107 = vmatprep.subr.mxu0 0.0
    %108 = vmatpush1.msra.mxu0 0.0
    %109 = vmatprep.subr.mxu0 0.0
    %110 = vmatpush1.msra.mxu0 0.0
    %111 = vmatprep.subr.mxu0 0.0
    %112 = vmatpush1.msra.mxu0 0.0
    %113 = vmatprep.subr.mxu0 0.0
    %114 = vmatpush1.msra.mxu0 0.0
    %115 = vmatprep.subr.mxu0 0.0
    %116 = vmatpush1.msra.mxu0 0.0
    %117 = vmatprep.subr.mxu0 0.0
    %118 = vmatpush1.msra.mxu0 0.0
    %119 = vmatprep.subr.mxu0 0.0
    %120 = vmatpush1.msra.mxu0 0.0
    %121 = vmatprep.subr.mxu0 0.0
    %122 = vmatpush1.msra.mxu0 0.0
    %123 = vmatprep.subr.mxu0 0.0
    %124 = vmatpush1.msra.mxu0 0.0
    %125 = vmatprep.subr.mxu0 0.0
    %126 = vmatpush1.msra.mxu0 0.0
    %127 = vmatprep.subr.mxu0 0.0
    %128 = vmatpush1.msra.mxu0 0.0
    %129 = vmatprep.subr.mxu0 0.0
    %130 = vmatpush1.msra.mxu0 0.0
    %131 = vmatprep.subr.mxu0 0.0
    %132 = vmatpush1.msra.mxu0 0.0
    %133 = vmatprep.mubr.f32.mxu0 0.0
    %134 = vmatmul.mubr.f32.gmra.mrb[0].mxu0 %v64
    %v135 = vpop.f32.mrb[0].mxu0
    %v136 = vadd.f32 %v60, %v135
    %v137 = vpop.f32.mrb[0].mxu0
    %138 = vmatprep.mubr.f32.mxu0 0.0
    %139 = vmatmul.mubr.f32.gmra.mrb[0].mxu0 %v67
    %v140 = vpop.f32.mrb[0].mxu0
    %v141 = vadd.f32 %v60, %v140
    %v142 = vpop.f32.mrb[0].mxu0
    %143 = vdwg.mxu0
    %144 = vst [vmem:[#allocation7] sm:$0x3] %v136
    %v147 = vunpack.c.l.s4 1983009808
    %v148 = vunpack.c.0.s8 %v147
    %v149 = vlaneseq
    %v150 = vshrl.u32 %v149, 7
    %v151 = vsub.s32 %v148, %v150
    %v152 = vrot.slane %v136, %v151
    %v153 = vcombine.high %v152, %v152
    %155 = vst [vmem:[#allocation7 + $0x2] sm:$0x3] %v153
    %v156 = vcombine.high %v136, %v136
    %v158 = vunpack.c.l.s4 1983009808
    %v159 = vunpack.c.0.s8 %v158
    %v160 = vlaneseq
    %v161 = vshrl.u32 %v160, 7
    %v162 = vsub.s32 %v159, %v161
    %v163 = vrot.slane %v156, %v162
    %165 = vst [vmem:[#allocation7 + $0x4] sm:$0x3] %v163
    %v166 = vcombine.high %v163, %v163
    %168 = vst [vmem:[#allocation7 + $0x6] sm:$0x3] %v166
    %169 = vst [vmem:[#allocation7 + $0x8] sm:$0x3] %v141
    %v172 = vunpack.c.l.s4 1983009808
    %v173 = vunpack.c.0.s8 %v172
    %v174 = vlaneseq
    %v175 = vshrl.u32 %v174, 7
    %v176 = vsub.s32 %v173, %v175
    %v177 = vrot.slane %v141, %v176
    %v178 = vcombine.high %v177, %v177
    %180 = vst [vmem:[#allocation7 + $0xa] sm:$0x3] %v178
    %v181 = vcombine.high %v141, %v141
    %v183 = vunpack.c.l.s4 1983009808
    %v184 = vunpack.c.0.s8 %v183
    %v185 = vlaneseq
    %v186 = vshrl.u32 %v185, 7
    %v187 = vsub.s32 %v184, %v186
    %v188 = vrot.slane %v181, %v187
    %190 = vst [vmem:[#allocation7 + $0xc] sm:$0x3] %v188
    %v191 = vcombine.high %v188, %v188
    %193 = vst [vmem:[#allocation7 + $0xe] sm:$0x3] %v191
    // Predicated region
    $region22: #{tpu_custom_call.1} parent=1 // pred_check
      _
    $region23: #{tpu_custom_call.1} parent=1 // pred_check_branch
      %195 = sbr.rel (0) target = $region25
    $region24: #{tpu_custom_call.1} parent=1 // pred_region
      %s197 = ssub.s32 256, 256
      %198 = vsyncadd [#allocation4], %s197
      %s200 = sshll.u32 [#allocation7], 4
      %s201 = int_to_ptr.vmem [resolvable:$true] %s200
      %203 = dma.vmem_to_hbm [thread:$0]  %s201, 256, %s3, [#allocation4]
    $region25: #{tpu_custom_call.1} parent=1 // pred_fallthru
      _
    // Predicated region
    $region26: #{tpu_custom_call.1} parent=1 // pred_check
      _
    $region27: #{tpu_custom_call.1} parent=1 // pred_check_branch
      %205 = sbr.rel (0) target = $region29
    $region28: #{tpu_custom_call.1} parent=1 // pred_region
      %206 = dma.done [#allocation4], 256
    $region29: #{tpu_custom_call.1} parent=1 // pred_fallthru
      _
    %207 = vsyncpa [#allocation3], 1
    %208 = vsyncpa [#allocation6], 1
    %209 = vsyncpa [#allocation4], 1

</llo_original>
